<compile_context>
chip_gen: v7x
topology: tpu7x:2x2x1
jax: 0.10.0
libtpu: 0.0.40
codegen_flags: <defaults>
</compile_context>

<pallas_src>
import math

import jax
import jax.numpy as jnp
from jax.experimental import pallas as pl
from jax.experimental.pallas import tpu as pltpu

_LANE = 128
_MAX_LANES = 8192                        # cap on block width (lanes)
_TARGET_BLOCK_BYTES = 2 * 1024 * 1024    # ~2 MiB per block


def _copy_kernel(x_ref, o_ref):
    # Lane-dense 2D identity copy; the flatten itself is a free metadata
    # reshape done in the wrapper.
    o_ref[...] = x_ref[...]


def _lane_dense_view(total):
    """Pick (rows2, cols2) with cols2 the largest multiple of 128 (<= _MAX_LANES)
    that divides `total`.  Returns None if total is not a multiple of 128."""
    if total % _LANE != 0:
        return None
    q = total // _LANE
    kmax = min(q, _MAX_LANES // _LANE)
    k = 1
    for cand in range(kmax, 0, -1):
        if q % cand == 0:
            k = cand
            break
    cols2 = _LANE * k
    return total // cols2, cols2


def _choose_blocks(rows, cols, itemsize):
    """Pick (block_rows, block_cols) satisfying the (8,128) tiling rules and the
    ~2 MiB per-block budget."""
    # Lane (last) dim: full extent (always legal) or a multiple of 128.
    if cols <= _MAX_LANES:
        bc = cols
    else:
        bc = _MAX_LANES
    # Sublane dim: full extent (always legal) or a multiple of 8, capped so one
    # block stays ~_TARGET_BLOCK_BYTES (double-buffered in+out fits the default
    # scoped VMEM limit on v5e/v6e/v7x).
    max_rows = max(1, _TARGET_BLOCK_BYTES // (bc * itemsize))
    if rows <= max_rows:
        br = rows
    else:
        br = max(8, (max_rows // 8) * 8)
    return br, bc


def _identity_copy_2d(x2: jax.Array) -> jax.Array:
    rows, cols = x2.shape
    br, bc = _choose_blocks(rows, cols, jnp.dtype(x2.dtype).itemsize)
    grid = (pl.cdiv(rows, br), pl.cdiv(cols, bc))
    return pl.pallas_call(
        _copy_kernel,
        out_shape=jax.ShapeDtypeStruct((rows, cols), x2.dtype),
        grid=grid,
        in_specs=[pl.BlockSpec((br, bc), lambda i, j: (i, j))],
        out_specs=pl.BlockSpec((br, bc), lambda i, j: (i, j)),
        compiler_params=pltpu.CompilerParams(
            dimension_semantics=("parallel", "parallel"),
        ),
    )(x2)


def flatten(x: jax.Array, start_dim: int = 1) -> jax.Array:
    """Equivalent of torch.Tensor.flatten(start_dim=start_dim)."""
    nd = x.ndim
    sd = start_dim + nd if start_dim < 0 else start_dim
    if nd == 0:
        return x.reshape(1)
    if nd <= sd:
        # Nothing to flatten (matches torch behaviour for e.g. 1-D inputs).
        return x

    lead = x.shape[:sd]
    rows = math.prod(lead) if lead else 1
    cols = math.prod(x.shape[sd:])
    out_shape = lead + (cols,)
    total = rows * cols

    if total == 0:
        # Empty tensor: pure metadata reshape, no kernel needed.
        return x.reshape(out_shape)

    # Pick the most lane-dense 2D view of the (contiguous, row-major) data.
    view = _lane_dense_view(total)
    if view is None:
        view = (rows, cols)
    vrows, vcols = view

    # Metadata-only reshape in the wrapper (free); kernel is a lane-dense copy.
    x2 = x.reshape(vrows, vcols)
    out2 = _identity_copy_2d(x2)
    return out2.reshape(out_shape)


flatten_start_dim1 = jax.jit(lambda x: flatten(x, 1))


if __name__ == "__main__":
    key = jax.random.PRNGKey(0)
    # Small NCHW input consistent with the module's typical use after convs.
    x = jax.random.normal(key, (2, 4, 16, 16), dtype=jnp.float32)

    out = jax.block_until_ready(flatten_start_dim1(x))

    # Verify against the pure-JAX reference (torch's x.flatten(start_dim=1)).
    ref = x.reshape(x.shape[0], -1)
    assert out.shape == ref.shape, (out.shape, ref.shape)
    assert out.dtype == ref.dtype, (out.dtype, ref.dtype)
    assert bool(jnp.array_equal(out, ref)), "Pallas flatten mismatch vs reference"

    # Also exercise the non-128-aligned fallback path (total = 210 elements).
    x2 = jax.random.normal(jax.random.PRNGKey(0), (2, 3, 5, 7), dtype=jnp.float32)
    out2 = jax.block_until_ready(flatten(x2, 1))
    ref2 = x2.reshape(2, -1)
    assert out2.shape == ref2.shape, (out2.shape, ref2.shape)
    assert bool(jnp.array_equal(out2, ref2)), "Pallas flatten (fallback) mismatch"

    print("KERNEL_OK")
</pallas_src>

<mosaic_0001>
module attributes {stable_mosaic.version = 11 : i64} {
  func.func @_copy_kernel(%arg0: i32, %arg1: i32, %arg2: memref<1x2048xf32, #tpu.memory_space<vmem>>, %arg3: memref<1x2048xf32, #tpu.memory_space<vmem>>) attributes {dimension_semantics = [#tpu.dimension_semantics<parallel>, #tpu.dimension_semantics<parallel>], iteration_bounds = array<i64: 1, 1>, scalar_prefetch = 0 : i64, scratch_operands = 0 : i64, tpu.core_type = #tpu.core_type<tc>, window_params = [{transform_indices = @transform_0, window_bounds = array<i64: 1, 2048>}, {transform_indices = @transform_1, window_bounds = array<i64: 1, 2048>}]} {
    %c0 = arith.constant 0 : index
    %c0_0 = arith.constant 0 : index
    %0 = vector.load %arg2[%c0, %c0_0] : memref<1x2048xf32, #tpu.memory_space<vmem>>, vector<1x2048xf32>
    %c0_1 = arith.constant 0 : index
    %c0_2 = arith.constant 0 : index
    %1 = vector.load %arg3[%c0_1, %c0_2] : memref<1x2048xf32, #tpu.memory_space<vmem>>, vector<1x2048xf32>
    tpu.vector_store %arg3[%c0_1, %c0_2], %0 {strides = array<i32>} : memref<1x2048xf32, #tpu.memory_space<vmem>>, vector<1x2048xf32>,
    return
  }
  func.func @transform_0(%arg0: i32, %arg1: i32) -> (i32, i32) {
    %c0_i32 = arith.constant 0 : i32
    return %arg0, %arg1 : i32, i32
  }
  func.func @transform_1(%arg0: i32, %arg1: i32) -> (i32, i32) {
    %c0_i32 = arith.constant 0 : i32
    return %arg0, %arg1 : i32, i32
  }
}

</mosaic_0001>

<llo_original>
// kernel: _lambda_.1
$region0: #{_lambda_.1}
  #allocation0 [shape = 'u32[]', space=smem, size = 0x4, offset = 0x4, fixed_abs, tag = 'smem constant byte address 0x4 - core index']
  #allocation1 [shape = 'u32[144,128]{1,0:T(1,128)}', space=vmem, size = 0x12000, scoped, tag = 'internal scratch']
  %s0 = inlined_call_operand.vmem [shape: f32[1,2048], index: 0, kind: input, shape index: {}]
  %s1 = inlined_call_operand.vmem [shape: f32[1,2048], index: 1, kind: output, shape index: {}]
  %s2 = sld [smem:[#allocation0]]
  $region14: #{_lambda_.1} parent=0
    _
  %s4 = ssub.s32 1, %s2
  %s5 = scalar_select 0, %s4, %s2
  // Predicated region
  $region2: #{_lambda_.1} parent=0 // pred_check
    _
  $region3: #{_lambda_.1} parent=0 // pred_check_branch
    %7 = sbr.rel (0) target = $region5
  $region4: #{_lambda_.1} parent=0 // pred_region
    _
  $region5: #{_lambda_.1} parent=0 // pred_fallthru
    _
  %v8 = vld [vmem:[%s0] sm:$0xff]
  %v9 = vld [vmem:[%s0 + $0x8] sm:$0xff]
  %10 = vst [vmem:[%s1] sm:$0xff] %v8
  %11 = vst [vmem:[%s1 + $0x8] sm:$0xff] %v9
  // Predicated region
  $region6: #{_lambda_.1} parent=0 // pred_check
    _
  $region7: #{_lambda_.1} parent=0 // pred_check_branch
    %13 = sbr.rel (0) target = $region9
  $region8: #{_lambda_.1} parent=0 // pred_region
    _
  $region9: #{_lambda_.1} parent=0 // pred_fallthru
    _
  // Predicated region
  $region10: #{_lambda_.1} parent=0 // pred_check
    _
  $region11: #{_lambda_.1} parent=0 // pred_check_branch
    %15 = sbr.rel (0) target = $region13
  $region12: #{_lambda_.1} parent=0 // pred_region
    _
  $region13: #{_lambda_.1} parent=0 // pred_fallthru
    _

</llo_original>
